<compile_context>
chip_gen: v6e
topology: v6e:2x2x1
jax: 0.10.0
libtpu: 0.0.40
codegen_flags: <defaults>
</compile_context>

<pallas_src>
import functools

import jax
import jax.numpy as jnp
from jax.experimental import pallas as pl
from jax.experimental.pallas import tpu as pltpu

_SUB_ROWS = 512  # inner row chunk: keeps per-chunk f32 intermediates in vregs


def _softplus(x):
    # numerically stable softplus: max(x,0) + log1p(exp(-|x|))
    return jnp.maximum(x, 0.0) + jnp.log1p(jnp.exp(-jnp.abs(x)))


def _decoder_kernel(sub, n_sub, x_ref, w1_ref, b1_ref, w2_ref, b2_ref,
                    w3_ref, b3_ref, out_ref):
    """Fused Linear->ReLU->Linear->ReLU->Linear over one row tile.

    x_ref  : (row_tile, D_in)   input rows (natural orientation)
    wK_ref : (in_K, out_K)      weights (matmul dtype)
    bK_ref : (1, out_K)         float32 biases
    out_ref: (row_tile, D_out)  float32
    """
    w1 = w1_ref[...]
    w2 = w2_ref[...]
    w3 = w3_ref[...]
    b1 = b1_ref[...]
    b2 = b2_ref[...]
    b3 = b3_ref[...]
    # Static chunk loop over sub-tiles of the row block (bounds vreg pressure).
    for c in range(n_sub):
        lo, hi = c * sub, (c + 1) * sub
        x = x_ref[lo:hi, :].astype(w1.dtype)
        h = jnp.dot(x, w1, preferred_element_type=jnp.float32) + b1
        h = jnp.maximum(h, 0.0).astype(w2.dtype)
        h = jnp.dot(h, w2, preferred_element_type=jnp.float32) + b2
        h = jnp.maximum(h, 0.0).astype(w3.dtype)
        o = jnp.dot(h, w3, preferred_element_type=jnp.float32) + b3
        out_ref[lo:hi, :] = o.astype(out_ref.dtype)


def _choose_row_tiling(rows, row_tile):
    """Pick (row_tile, sub_rows, grid_len) satisfying TPU block constraints."""
    if rows <= _SUB_ROWS:
        # Single grid step whose block exactly equals the full row extent
        # (block dim == full array dim is always a legal block shape).
        return rows, rows, 1
    # Big tiles amortize the ~0.35us per-grid-step overhead; keep a multiple
    # of the inner chunk so the static chunk loop tiles it exactly.
    row_tile = max(_SUB_ROWS, (int(row_tile) // _SUB_ROWS) * _SUB_ROWS)
    # Cap so the grid has >= 2 steps: on v7x both TensorCores can then pick up
    # work along the "parallel" axis (no effect on single-TC v5e/v6e).
    max_tile = ((rows + 1) // 2 + _SUB_ROWS - 1) // _SUB_ROWS * _SUB_ROWS
    row_tile = min(row_tile, max(max_tile, _SUB_ROWS))
    grid_len = pl.cdiv(rows, row_tile)
    return row_tile, _SUB_ROWS, grid_len


def deterministic_decoder_forward(decoder_input, params, *, row_tile=2048,
                                  matmul_dtype=jnp.float32):
    """Pallas forward pass for DeterministicDecoder.

    decoder_input: (B, N, D_in) float32
    params: dict with w1,b1,w2,b2,w3,b3 (Linear weights stored as (in, out)).
    Returns (mu_a, log_sigma_a, sigma_a, mu_b, log_sigma_b, sigma_b),
    each of shape (B, N, D_out // 4).

    matmul_dtype=jnp.bfloat16 is available for real-TPU runs (f32 accumulation
    via preferred_element_type); default float32 matches PyTorch exactly.
    """
    B, N, D_in = decoder_input.shape
    w1, b1 = params["w1"], params["b1"]
    w2, b2 = params["w2"], params["b2"]
    w3, b3 = params["w3"], params["b3"]
    H1, H2, D_out = w1.shape[1], w2.shape[1], w3.shape[1]
    assert D_out % 4 == 0, "last output size must be divisible by 4 for chunk"

    rows = B * N
    row_tile, sub, grid_len = _choose_row_tiling(rows, int(row_tile))
    n_sub = row_tile // sub

    # Natural (rows, features) layout: no wrapper transpose / pad copies of x.
    x2d = decoder_input.reshape(rows, D_in)

    w1c = w1.astype(matmul_dtype)
    w2c = w2.astype(matmul_dtype)
    w3c = w3.astype(matmul_dtype)
    b1c = b1.reshape(1, -1).astype(jnp.float32)
    b2c = b2.reshape(1, -1).astype(jnp.float32)
    b3c = b3.reshape(1, -1).astype(jnp.float32)

    # Weights/biases: full-array blocks with constant index maps -> resident
    # in VMEM, not re-DMA'd per grid step.
    full = lambda shape: pl.BlockSpec(shape, lambda i: (0, 0))

    flops = 2 * rows * (D_in * H1 + H1 * H2 + H2 * D_out)
    bytes_accessed = 4 * (rows * (D_in + D_out)
                          + D_in * H1 + H1 * H2 + H2 * D_out
                          + H1 + H2 + D_out)

    out2d = pl.pallas_call(
        functools.partial(_decoder_kernel, sub, n_sub),
        out_shape=jax.ShapeDtypeStruct((rows, D_out), jnp.float32),
        grid_spec=pltpu.PrefetchScalarGridSpec(
            num_scalar_prefetch=0,
            grid=(grid_len,),
            in_specs=[
                pl.BlockSpec((row_tile, D_in), lambda i: (i, 0)),  # x tile
                full((D_in, H1)), full((1, H1)),                   # layer 1
                full((H1, H2)), full((1, H2)),                     # layer 2
                full((H2, D_out)), full((1, D_out)),               # layer 3
            ],
            out_specs=pl.BlockSpec((row_tile, D_out), lambda i: (i, 0)),
        ),
        compiler_params=pltpu.CompilerParams(
            dimension_semantics=("parallel",)),
        cost_estimate=pl.CostEstimate(
            flops=flops, transcendentals=0, bytes_accessed=bytes_accessed),
    )(x2d, w1c, b1c, w2c, b2c, w3c, b3c)

    out = out2d.reshape(B, N, D_out)

    d = D_out // 4
    mu_a = out[..., 0 * d:1 * d]
    log_sigma_a = out[..., 1 * d:2 * d]
    mu_b = out[..., 2 * d:3 * d]
    log_sigma_b = out[..., 3 * d:4 * d]
    # sigma transform only on the columns that need it (tiny elementwise op).
    sigma_a = 0.1 + 0.9 * _softplus(log_sigma_a)
    sigma_b = 0.1 + 0.9 * _softplus(log_sigma_b)

    # TODO(synk): torch.distributions.MultivariateNormal objects have no Pallas
    # equivalent; we return (mu, log_sigma, sigma) — sigma is the diagonal of
    # the covariance matrix that MultivariateNormal would be built from.
    return mu_a, log_sigma_a, sigma_a, mu_b, log_sigma_b, sigma_b


def init_params(key, input_size, output_sizes):
    """Deterministic init mimicking nn.Linear defaults (uniform ±1/sqrt(fan_in))."""
    sizes = [input_size] + list(output_sizes)
    params = {}
    for li in range(len(output_sizes)):
        fan_in, fan_out = sizes[li], sizes[li + 1]
        key, kw, kb = jax.random.split(key, 3)
        bound = 1.0 / jnp.sqrt(fan_in)
        params[f"w{li + 1}"] = jax.random.uniform(
            kw, (fan_in, fan_out), jnp.float32, -bound, bound)
        params[f"b{li + 1}"] = jax.random.uniform(
            kb, (fan_out,), jnp.float32, -bound, bound)
    return params


def _reference_forward(decoder_input, params):
    """Plain-JAX reference for correctness checking."""
    B, N, _ = decoder_input.shape
    x = decoder_input.reshape(B * N, -1)
    h = jnp.maximum(x @ params["w1"] + params["b1"], 0.0)
    h = jnp.maximum(h @ params["w2"] + params["b2"], 0.0)
    o = (h @ params["w3"] + params["b3"]).reshape(B, N, -1)
    d = o.shape[-1] // 4
    mu_a, ls_a, mu_b, ls_b = (o[..., i * d:(i + 1) * d] for i in range(4))
    sp = lambda v: jnp.maximum(v, 0.0) + jnp.log1p(jnp.exp(-jnp.abs(v)))
    return mu_a, ls_a, 0.1 + 0.9 * sp(ls_a), mu_b, ls_b, 0.1 + 0.9 * sp(ls_b)


if __name__ == "__main__":
    # Small CNP-decoder shapes: input_size = x_dim + representation_dim,
    # output_sizes ends in 4*y_dim (chunked into mu_a, log_sigma_a, mu_b, log_sigma_b).
    input_size = 32
    output_sizes = [64, 64, 16]   # last layer: 4 chunks of size 4

    key = jax.random.PRNGKey(0)
    key, kx = jax.random.split(key)

    fwd = jax.jit(deterministic_decoder_forward)

    # Test 1: tiny shape (single grid step, block == full row extent).
    B, N = 2, 8
    decoder_input = jax.random.normal(kx, (B, N, input_size), jnp.float32)
    params = init_params(key, input_size, output_sizes)
    refs = _reference_forward(decoder_input, params)
    outs = jax.block_until_ready(fwd(decoder_input, params))
    for o, r in zip(outs, refs):
        assert o.shape == r.shape
        assert jnp.allclose(o, r, atol=1e-5, rtol=1e-5), "small-shape mismatch"

    # Test 2: larger row count — exercises multi-step grid, the inner 512-row
    # chunk loop and the padded (partial) last block.
    B2, N2 = 3, 500   # rows = 1500 -> row_tile 1024, grid of 2, 2 sub-chunks
    key, kx2 = jax.random.split(key)
    decoder_input2 = jax.random.normal(kx2, (B2, N2, input_size), jnp.float32)
    refs2 = _reference_forward(decoder_input2, params)
    outs2 = jax.block_until_ready(fwd(decoder_input2, params))
    for o, r in zip(outs2, refs2):
        assert o.shape == r.shape
        assert jnp.allclose(o, r, atol=1e-4, rtol=1e-4), "large-shape mismatch"

    print("KERNEL_OK")
</pallas_src>

<mosaic_0001>
module attributes {stable_mosaic.version = 11 : i64} {
  func.func @_decoder_kernel(%arg0: i32, %arg1: memref<16x32xf32, #tpu.memory_space<vmem>>, %arg2: memref<32x64xf32, #tpu.memory_space<vmem>>, %arg3: memref<1x64xf32, #tpu.memory_space<vmem>>, %arg4: memref<64x64xf32, #tpu.memory_space<vmem>>, %arg5: memref<1x64xf32, #tpu.memory_space<vmem>>, %arg6: memref<64x16xf32, #tpu.memory_space<vmem>>, %arg7: memref<1x16xf32, #tpu.memory_space<vmem>>, %arg8: memref<16x16xf32, #tpu.memory_space<vmem>>) attributes {dimension_semantics = [#tpu.dimension_semantics<parallel>], iteration_bounds = array<i64: 1>, scalar_prefetch = 0 : i64, scratch_operands = 0 : i64, tpu.core_type = #tpu.core_type<tc>, window_params = [{transform_indices = @transform_0, window_bounds = array<i64: 16, 32>}, {pipeline_mode = #tpu.pipeline_mode<synchronous>, transform_indices = @transform_1, window_bounds = array<i64: 32, 64>}, {pipeline_mode = #tpu.pipeline_mode<synchronous>, transform_indices = @transform_2, window_bounds = array<i64: 1, 64>}, {pipeline_mode = #tpu.pipeline_mode<synchronous>, transform_indices = @transform_3, window_bounds = array<i64: 64, 64>}, {pipeline_mode = #tpu.pipeline_mode<synchronous>, transform_indices = @transform_4, window_bounds = array<i64: 1, 64>}, {pipeline_mode = #tpu.pipeline_mode<synchronous>, transform_indices = @transform_5, window_bounds = array<i64: 64, 16>}, {pipeline_mode = #tpu.pipeline_mode<synchronous>, transform_indices = @transform_6, window_bounds = array<i64: 1, 16>}, {transform_indices = @transform_7, window_bounds = array<i64: 16, 16>}]} {
    %c0 = arith.constant 0 : index
    %c0_0 = arith.constant 0 : index
    %0 = vector.load %arg2[%c0, %c0_0] : memref<32x64xf32, #tpu.memory_space<vmem>>, vector<32x64xf32>
    %c0_1 = arith.constant 0 : index
    %c0_2 = arith.constant 0 : index
    %1 = vector.load %arg4[%c0_1, %c0_2] : memref<64x64xf32, #tpu.memory_space<vmem>>, vector<64x64xf32>
    %c0_3 = arith.constant 0 : index
    %c0_4 = arith.constant 0 : index
    %2 = vector.load %arg6[%c0_3, %c0_4] : memref<64x16xf32, #tpu.memory_space<vmem>>, vector<64x16xf32>
    %c0_5 = arith.constant 0 : index
    %c0_6 = arith.constant 0 : index
    %3 = vector.load %arg3[%c0_5, %c0_6] : memref<1x64xf32, #tpu.memory_space<vmem>>, vector<1x64xf32>
    %c0_7 = arith.constant 0 : index
    %c0_8 = arith.constant 0 : index
    %4 = vector.load %arg5[%c0_7, %c0_8] : memref<1x64xf32, #tpu.memory_space<vmem>>, vector<1x64xf32>
    %c0_9 = arith.constant 0 : index
    %c0_10 = arith.constant 0 : index
    %5 = vector.load %arg7[%c0_9, %c0_10] : memref<1x16xf32, #tpu.memory_space<vmem>>, vector<1x16xf32>
    %c0_11 = arith.constant 0 : index
    %c0_12 = arith.constant 0 : index
    %6 = vector.load %arg1[%c0_11, %c0_12] : memref<16x32xf32, #tpu.memory_space<vmem>>, vector<16x32xf32>
    %cst = arith.constant dense<0.000000e+00> : vector<16x64xf32>
    %7 = tpu.matmul %6, %0, %cst {dimension_numbers = #tpu.dot_dimension_numbers<[1], [0], [0], [1], [0, 0, 1, 1], [], []>} : vector<16x32xf32>, vector<32x64xf32>, vector<16x64xf32> -> vector<16x64xf32>
    %8 = vector.broadcast %3 : vector<1x64xf32> to vector<16x64xf32>
    %9 = arith.addf %7, %8 : vector<16x64xf32>
    %cst_13 = arith.constant 0.000000e+00 : f32
    %10 = vector.broadcast %cst_13 : f32 to vector<16x64xf32>
    %11 = arith.maximumf %9, %10 : vector<16x64xf32>
    %cst_14 = arith.constant dense<0.000000e+00> : vector<16x64xf32>
    %12 = tpu.matmul %11, %1, %cst_14 {dimension_numbers = #tpu.dot_dimension_numbers<[1], [0], [0], [1], [0, 0, 1, 1], [], []>} : vector<16x64xf32>, vector<64x64xf32>, vector<16x64xf32> -> vector<16x64xf32>
    %13 = vector.broadcast %4 : vector<1x64xf32> to vector<16x64xf32>
    %14 = arith.addf %12, %13 : vector<16x64xf32>
    %cst_15 = arith.constant 0.000000e+00 : f32
    %15 = vector.broadcast %cst_15 : f32 to vector<16x64xf32>
    %16 = arith.maximumf %14, %15 : vector<16x64xf32>
    %cst_16 = arith.constant dense<0.000000e+00> : vector<16x16xf32>
    %17 = tpu.matmul %16, %2, %cst_16 {dimension_numbers = #tpu.dot_dimension_numbers<[1], [0], [0], [1], [0, 0, 1, 1], [], []>} : vector<16x64xf32>, vector<64x16xf32>, vector<16x16xf32> -> vector<16x16xf32>
    %18 = vector.broadcast %5 : vector<1x16xf32> to vector<16x16xf32>
    %19 = arith.addf %17, %18 : vector<16x16xf32>
    %c0_17 = arith.constant 0 : index
    %c0_18 = arith.constant 0 : index
    %20 = vector.load %arg8[%c0_17, %c0_18] : memref<16x16xf32, #tpu.memory_space<vmem>>, vector<16x16xf32>
    tpu.vector_store %arg8[%c0_17, %c0_18], %19 {strides = array<i32>} : memref<16x16xf32, #tpu.memory_space<vmem>>, vector<16x16xf32>,
    return
  }
  func.func @transform_0(%arg0: i32) -> (i32, i32) {
    %c0_i32 = arith.constant 0 : i32
    %c0_i32_0 = arith.constant 0 : i32
    return %arg0, %c0_i32 : i32, i32
  }
  func.func @transform_1(%arg0: i32) -> (i32, i32) {
    %c0_i32 = arith.constant 0 : i32
    %c0_i32_0 = arith.constant 0 : i32
    %c0_i32_1 = arith.constant 0 : i32
    return %c0_i32, %c0_i32_0 : i32, i32
  }
  func.func @transform_2(%arg0: i32) -> (i32, i32) {
    %c0_i32 = arith.constant 0 : i32
    %c0_i32_0 = arith.constant 0 : i32
    %c0_i32_1 = arith.constant 0 : i32
    return %c0_i32, %c0_i32_0 : i32, i32
  }
  func.func @transform_3(%arg0: i32) -> (i32, i32) {
    %c0_i32 = arith.constant 0 : i32
    %c0_i32_0 = arith.constant 0 : i32
    %c0_i32_1 = arith.constant 0 : i32
    return %c0_i32, %c0_i32_0 : i32, i32
  }
  func.func @transform_4(%arg0: i32) -> (i32, i32) {
    %c0_i32 = arith.constant 0 : i32
    %c0_i32_0 = arith.constant 0 : i32
    %c0_i32_1 = arith.constant 0 : i32
    return %c0_i32, %c0_i32_0 : i32, i32
  }
  func.func @transform_5(%arg0: i32) -> (i32, i32) {
    %c0_i32 = arith.constant 0 : i32
    %c0_i32_0 = arith.constant 0 : i32
    %c0_i32_1 = arith.constant 0 : i32
    return %c0_i32, %c0_i32_0 : i32, i32
  }
  func.func @transform_6(%arg0: i32) -> (i32, i32) {
    %c0_i32 = arith.constant 0 : i32
    %c0_i32_0 = arith.constant 0 : i32
    %c0_i32_1 = arith.constant 0 : i32
    return %c0_i32, %c0_i32_0 : i32, i32
  }
  func.func @transform_7(%arg0: i32) -> (i32, i32) {
    %c0_i32 = arith.constant 0 : i32
    %c0_i32_0 = arith.constant 0 : i32
    return %arg0, %c0_i32 : i32, i32
  }
}

</mosaic_0001>

<llo_original>
// kernel: deterministic_decoder_forward.1
$region0: #{deterministic_decoder_forward.1}
  #allocation0 [shape = 'u32[]', space=smem, size = 0x4, offset = 0x4, fixed_abs, tag = 'smem constant byte address 0x4 - core index']
  #allocation1 [shape = 'u32[144,128]{1,0:T(1,128)}', space=vmem, size = 0x12000, scoped, tag = 'internal scratch']
  %s0 = inlined_call_operand.hbm [shape: f32[16,32], index: 0, kind: input, shape index: {}]
  %s1 = inlined_call_operand.vmem [shape: f32[32,64], index: 1, kind: input, shape index: {}]
  %s2 = inlined_call_operand.hbm [shape: f32[1,64], index: 2, kind: input, shape index: {}]
  %s3 = inlined_call_operand.vmem [shape: f32[64,64], index: 3, kind: input, shape index: {}]
  %s4 = inlined_call_operand.hbm [shape: f32[1,64], index: 4, kind: input, shape index: {}]
  %s5 = inlined_call_operand.vmem [shape: f32[64,16], index: 5, kind: input, shape index: {}]
  %s6 = inlined_call_operand.hbm [shape: f32[1,16], index: 6, kind: input, shape index: {}]
  %s7 = inlined_call_operand.vmem [shape: f32[16,16], index: 7, kind: output, shape index: {}]
  %s8 = sld [smem:[#allocation0]]
  $region54: #{deterministic_decoder_forward.1} parent=0
    _
  %s10 = ssub.s32 1, %s8
  %s11 = scalar_select 0, %s10, %s8
  $region1: #{deterministic_decoder_forward.1} parent=0
    #allocation2 [shape = 'u8[8192]{0}', space=vmem, size = 0x2000, scoped, tag = 'input window, operand 0, single buffered']
    #allocation3 [shape = 's32[1]{0}', space=sflag, size = 0x4, scoped, tag = 'scoped memory for deterministic_decoder_forward.1']
    #allocation4 [shape = 'u8[512]{0}', space=vmem, size = 0x400, scoped, tag = 'input window, operand 2, single buffered']
    #allocation5 [shape = 's32[1]{0}', space=sflag, size = 0x4, scoped, tag = 'scoped memory for deterministic_decoder_forward.1']
    #allocation6 [shape = 'u8[512]{0}', space=vmem, size = 0x400, scoped, tag = 'input window, operand 4, single buffered']
    #allocation7 [shape = 'u8[512]{0}', space=vmem, size = 0x400, scoped, tag = 'input window, operand 6, single buffered']
    #allocation8 [shape = 's32[1]{0}', space=sflag, size = 0x4, scoped, tag = 'scoped memory for deterministic_decoder_forward.1']
    %12 = vsyncpa [#allocation3], 0
    %13 = vsyncpa [#allocation5], 0
    %14 = vsyncpa [#allocation8], 0
    // Predicated region
    $region2: #{deterministic_decoder_forward.1} parent=1 // pred_check
      _
    $region3: #{deterministic_decoder_forward.1} parent=1 // pred_check_branch
      %16 = sbr.rel (0) target = $region5
    $region4: #{deterministic_decoder_forward.1} parent=1 // pred_region
      %s18 = ssub.s32 256, 256
      %19 = vsyncadd [#allocation3], %s18
      %s20 = sshll.u32 [#allocation2], 4
      %s21 = int_to_ptr.vmem [resolvable:$true] %s20
      %26 = dma.hbm_to_vmem [thread:$0]  %s0, 256, %s21, [#allocation3], 128, 128, 8
    $region5: #{deterministic_decoder_forward.1} parent=1 // pred_fallthru
      _
    // Predicated region
    $region6: #{deterministic_decoder_forward.1} parent=1 // pred_check
      _
    $region7: #{deterministic_decoder_forward.1} parent=1 // pred_check_branch
      %28 = sbr.rel (0) target = $region9
    $region8: #{deterministic_decoder_forward.1} parent=1 // pred_region
      _
    $region9: #{deterministic_decoder_forward.1} parent=1 // pred_fallthru
      _
    // Predicated region
    $region10: #{deterministic_decoder_forward.1} parent=1 // pred_check
      _
    $region11: #{deterministic_decoder_forward.1} parent=1 // pred_check_branch
      %30 = sbr.rel (0) target = $region13
    $region12: #{deterministic_decoder_forward.1} parent=1 // pred_region
      %s32 = ssub.s32 16, 16
      %33 = vsyncadd [#allocation5], %s32
      %s35 = sshll.u32 [#allocation4], 4
      %s36 = int_to_ptr.vmem [resolvable:$true] %s35
      %38 = dma.hbm_to_vmem [thread:$0]  %s2, 16, %s36, [#allocation5]
    $region13: #{deterministic_decoder_forward.1} parent=1 // pred_fallthru
      _
    // Predicated region
    $region14: #{deterministic_decoder_forward.1} parent=1 // pred_check
      _
    $region15: #{deterministic_decoder_forward.1} parent=1 // pred_check_branch
      %40 = sbr.rel (0) target = $region17
    $region16: #{deterministic_decoder_forward.1} parent=1 // pred_region
      _
    $region17: #{deterministic_decoder_forward.1} parent=1 // pred_fallthru
      _
    // Predicated region
    $region18: #{deterministic_decoder_forward.1} parent=1 // pred_check
      _
    $region19: #{deterministic_decoder_forward.1} parent=1 // pred_check_branch
      %42 = sbr.rel (0) target = $region21
    $region20: #{deterministic_decoder_forward.1} parent=1 // pred_region
      %s44 = ssub.s32 16, 16
      %45 = vsyncadd [#allocation5], %s44
      %s47 = sshll.u32 [#allocation6], 4
      %s48 = int_to_ptr.vmem [resolvable:$true] %s47
      %50 = dma.hbm_to_vmem [thread:$0]  %s4, 16, %s48, [#allocation5]
    $region21: #{deterministic_decoder_forward.1} parent=1 // pred_fallthru
      _
    // Predicated region
    $region22: #{deterministic_decoder_forward.1} parent=1 // pred_check
      _
    $region23: #{deterministic_decoder_forward.1} parent=1 // pred_check_branch
      %52 = sbr.rel (0) target = $region25
    $region24: #{deterministic_decoder_forward.1} parent=1 // pred_region
      _
    $region25: #{deterministic_decoder_forward.1} parent=1 // pred_fallthru
      _
    // Predicated region
    $region26: #{deterministic_decoder_forward.1} parent=1 // pred_check
      _
    $region27: #{deterministic_decoder_forward.1} parent=1 // pred_check_branch
      %54 = sbr.rel (0) target = $region29
    $region28: #{deterministic_decoder_forward.1} parent=1 // pred_region
      %s56 = ssub.s32 16, 16
      %57 = vsyncadd [#allocation8], %s56
      %s59 = sshll.u32 [#allocation7], 4
      %s60 = int_to_ptr.vmem [resolvable:$true] %s59
      %62 = dma.hbm_to_vmem [thread:$0]  %s6, 16, %s60, [#allocation8]
    $region29: #{deterministic_decoder_forward.1} parent=1 // pred_fallthru
      _
    // Predicated region
    $region30: #{deterministic_decoder_forward.1} parent=1 // pred_check
      _
    $region31: #{deterministic_decoder_forward.1} parent=1 // pred_check_branch
      %64 = sbr.rel (0) target = $region33
    $region32: #{deterministic_decoder_forward.1} parent=1 // pred_region
      %65 = dma.done [#allocation3], 256
    $region33: #{deterministic_decoder_forward.1} parent=1 // pred_fallthru
      _
    // Predicated region
    $region34: #{deterministic_decoder_forward.1} parent=1 // pred_check
      _
    $region35: #{deterministic_decoder_forward.1} parent=1 // pred_check_branch
      %67 = sbr.rel (0) target = $region37
    $region36: #{deterministic_decoder_forward.1} parent=1 // pred_region
      %68 = dma.done [#allocation5], 16
    $region37: #{deterministic_decoder_forward.1} parent=1 // pred_fallthru
      _
    // Predicated region
    $region38: #{deterministic_decoder_forward.1} parent=1 // pred_check
      _
    $region39: #{deterministic_decoder_forward.1} parent=1 // pred_check_branch
      %70 = sbr.rel (0) target = $region41
    $region40: #{deterministic_decoder_forward.1} parent=1 // pred_region
      %71 = dma.done [#allocation5], 16
    $region41: #{deterministic_decoder_forward.1} parent=1 // pred_fallthru
      _
    // Predicated region
    $region42: #{deterministic_decoder_forward.1} parent=1 // pred_check
      _
    $region43: #{deterministic_decoder_forward.1} parent=1 // pred_check_branch
      %73 = sbr.rel (0) target = $region45
    $region44: #{deterministic_decoder_forward.1} parent=1 // pred_region
      %74 = dma.done [#allocation8], 16
    $region45: #{deterministic_decoder_forward.1} parent=1 // pred_fallthru
      _
    %v75 = vld [vmem:[%s1] sm:$0xff]
    %v76 = vld [vmem:[%s1 + $0x8] sm:$0xff]
    %v77 = vld [vmem:[%s1 + $0x10] sm:$0xff]
    %v78 = vld [vmem:[%s1 + $0x18] sm:$0xff]
    %v79 = vld [vmem:[%s3] sm:$0xff]
    %v80 = vld [vmem:[%s3 + $0x8] sm:$0xff]
    %v81 = vld [vmem:[%s3 + $0x10] sm:$0xff]
    %v82 = vld [vmem:[%s3 + $0x18] sm:$0xff]
    %v83 = vld [vmem:[%s3 + $0x20] sm:$0xff]
    %v84 = vld [vmem:[%s3 + $0x28] sm:$0xff]
    %v85 = vld [vmem:[%s3 + $0x30] sm:$0xff]
    %v86 = vld [vmem:[%s3 + $0x38] sm:$0xff]
    %v87 = vld [vmem:[%s5] sm:$0xff]
    %v88 = vld [vmem:[%s5 + $0x8] sm:$0xff]
    %v89 = vld [vmem:[%s5 + $0x10] sm:$0xff]
    %v90 = vld [vmem:[%s5 + $0x18] sm:$0xff]
    %v91 = vld [vmem:[%s5 + $0x20] sm:$0xff]
    %v92 = vld [vmem:[%s5 + $0x28] sm:$0xff]
    %v93 = vld [vmem:[%s5 + $0x30] sm:$0xff]
    %v94 = vld [vmem:[%s5 + $0x38] sm:$0xff]
    %v95 = vld [vmem:[#allocation4] sm:$0x1]
    %v96 = vld [vmem:[#allocation6] sm:$0x1]
    %v97 = vld [vmem:[#allocation7] sm:$0x1]
    %v98 = vld [vmem:[#allocation2] sm:$0xff]
    %v99 = vld [vmem:[#allocation2 + $0x8] sm:$0xff]
    %v101 = vlaneseq
    %v102 = vshrl.u32 %v101, 7
    %v103 = vsub.s32 0, %v102
    %v104 = vrot.slane %v95, %v103
    %vm106 = vcmask 261120
    %v108 = vsel %vm106, %v98, 0
    %v111 = vsel %vm106, %v99, 0
    %113 = vmatprep.subr.mxu0 0.0
    %114 = vmatpush1.msra.mxu0 0.0
    %115 = vmatprep.subr.mxu0 0.0
    %116 = vmatpush1.msra.mxu0 0.0
    %117 = vmatprep.subr.mxu0 0.0
    %118 = vmatpush1.msra.mxu0 0.0
    %119 = vmatprep.subr.mxu0 0.0
    %120 = vmatpush1.msra.mxu0 0.0
    %121 = vmatprep.subr.mxu0 0.0
    %122 = vmatpush1.msra.mxu0 0.0
    %123 = vmatprep.subr.mxu0 0.0
    %124 = vmatpush1.msra.mxu0 0.0
    %125 = vmatprep.subr.mxu0 0.0
    %126 = vmatpush1.msra.mxu0 0.0
    %127 = vmatprep.subr.mxu0 0.0
    %128 = vmatpush1.msra.mxu0 0.0
    %129 = vmatprep.subr.mxu0 0.0
    %130 = vmatpush1.msra.mxu0 0.0
    %131 = vmatprep.subr.mxu0 0.0
    %132 = vmatpush1.msra.mxu0 0.0
    %133 = vmatprep.subr.mxu0 0.0
    %134 = vmatpush1.msra.mxu0 0.0
    %135 = vmatprep.subr.mxu0 0.0
    %136 = vmatpush1.msra.mxu0 0.0
    %137 = vmatprep.subr.mxu0 0.0
    %138 = vmatpush1.msra.mxu0 %v78
    %139 = vmatprep.subr.mxu0 0.0
    %140 = vmatpush1.msra.mxu0 %v77
    %141 = vmatprep.subr.mxu0 0.0
    %142 = vmatpush1.msra.mxu0 %v76
    %143 = vmatprep.subr.mxu0 0.0
    %144 = vmatpush1.msra.mxu0 %v75
    %145 = vmatprep.subr.mxu0 0.0
    %146 = vmatpush2.msra.mxu0 0.0
    %147 = vmatprep.subr.mxu0 0.0
    %148 = vmatpush2.msra.mxu0 0.0
    %149 = vmatprep.subr.mxu0 0.0
    %150 = vmatpush2.msra.mxu0 0.0
    %151 = vmatprep.subr.mxu0 0.0
    %152 = vmatpush2.msra.mxu0 0.0
    %153 = vmatprep.subr.mxu0 0.0
    %154 = vmatpush2.msra.mxu0 0.0
    %155 = vmatprep.subr.mxu0 0.0
    %156 = vmatpush2.msra.mxu0 0.0
    %157 = vmatprep.subr.mxu0 0.0
    %158 = vmatpush2.msra.mxu0 0.0
    %159 = vmatprep.subr.mxu0 0.0
    %160 = vmatpush2.msra.mxu0 0.0
    %161 = vmatprep.subr.mxu0 0.0
    %162 = vmatpush2.msra.mxu0 0.0
    %163 = vmatprep.subr.mxu0 0.0
    %164 = vmatpush2.msra.mxu0 0.0
    %165 = vmatprep.subr.mxu0 0.0
    %166 = vmatpush2.msra.mxu0 0.0
    %167 = vmatprep.subr.mxu0 0.0
    %168 = vmatpush2.msra.mxu0 0.0
    %169 = vmatprep.subr.mxu0 0.0
    %170 = vmatpush2.msra.mxu0 0.0
    %171 = vmatprep.subr.mxu0 0.0
    %172 = vmatpush2.msra.mxu0 0.0
    %173 = vmatprep.subr.mxu0 0.0
    %174 = vmatpush2.msra.mxu0 0.0
    %175 = vmatprep.subr.mxu0 0.0
    %176 = vmatpush2.msra.mxu0 0.0
    %177 = vmatprep.mubr.f32.mxu0 0.0
    %178 = vmatmul.mubr.f32.gmra.mxu0 %v108
    %v179 = vpop.f32.mrf.mxu0
    %v180 = vadd.f32 %v104, %v179
    %v181 = vpop.f32.mrf.mxu0
    %182 = vmatprep.mubr.f32.mxu0 0.0
    %183 = vmatmul.mubr.f32.gmra.mxu0 %v111
    %v184 = vpop.f32.mrf.mxu0
    %v185 = vadd.f32 %v104, %v184
    %v186 = vpop.f32.mrf.mxu0
    %187 = vdwg.mxu0
    %v188 = vmax.f32 %v180, 0.0
    %v189 = vmax.f32 %v185, 0.0
    %v191 = vlaneseq
    %v192 = vshrl.u32 %v191, 7
    %v193 = vsub.s32 0, %v192
    %v194 = vrot.slane %v96, %v193
    %vm196 = vcmask 523264
    %v198 = vsel %vm196, %v188, 0
    %v201 = vsel %vm196, %v189, 0
    %203 = vmatprep.subr.mxu0 0.0
    %204 = vmatpush1.msra.mxu0 0.0
    %205 = vmatprep.subr.mxu0 0.0
    %206 = vmatpush1.msra.mxu0 0.0
    %207 = vmatprep.subr.mxu0 0.0
    %208 = vmatpush1.msra.mxu0 0.0
    %209 = vmatprep.subr.mxu0 0.0
    %210 = vmatpush1.msra.mxu0 0.0
    %211 = vmatprep.subr.mxu0 0.0
    %212 = vmatpush1.msra.mxu0 0.0
    %213 = vmatprep.subr.mxu0 0.0
    %214 = vmatpush1.msra.mxu0 0.0
    %215 = vmatprep.subr.mxu0 0.0
    %216 = vmatpush1.msra.mxu0 0.0
    %217 = vmatprep.subr.mxu0 0.0
    %218 = vmatpush1.msra.mxu0 0.0
    %219 = vmatprep.subr.mxu0 0.0
    %220 = vmatpush1.msra.mxu0 %v86
    %221 = vmatprep.subr.mxu0 0.0
    %222 = vmatpush1.msra.mxu0 %v85
    %223 = vmatprep.subr.mxu0 0.0
    %224 = vmatpush1.msra.mxu0 %v84
    %225 = vmatprep.subr.mxu0 0.0
    %226 = vmatpush1.msra.mxu0 %v83
    %227 = vmatprep.subr.mxu0 0.0
    %228 = vmatpush1.msra.mxu0 %v82
    %229 = vmatprep.subr.mxu0 0.0
    %230 = vmatpush1.msra.mxu0 %v81
    %231 = vmatprep.subr.mxu0 0.0
    %232 = vmatpush1.msra.mxu0 %v80
    %233 = vmatprep.subr.mxu0 0.0
    %234 = vmatpush1.msra.mxu0 %v79
    %235 = vmatprep.subr.mxu0 0.0
    %236 = vmatpush2.msra.mxu0 0.0
    %237 = vmatprep.subr.mxu0 0.0
    %238 = vmatpush2.msra.mxu0 0.0
    %239 = vmatprep.subr.mxu0 0.0
    %240 = vmatpush2.msra.mxu0 0.0
    %241 = vmatprep.subr.mxu0 0.0
    %242 = vmatpush2.msra.mxu0 0.0
    %243 = vmatprep.subr.mxu0 0.0
    %244 = vmatpush2.msra.mxu0 0.0
    %245 = vmatprep.subr.mxu0 0.0
    %246 = vmatpush2.msra.mxu0 0.0
    %247 = vmatprep.subr.mxu0 0.0
    %248 = vmatpush2.msra.mxu0 0.0
    %249 = vmatprep.subr.mxu0 0.0
    %250 = vmatpush2.msra.mxu0 0.0
    %251 = vmatprep.subr.mxu0 0.0
    %252 = vmatpush2.msra.mxu0 0.0
    %253 = vmatprep.subr.mxu0 0.0
    %254 = vmatpush2.msra.mxu0 0.0
    %255 = vmatprep.subr.mxu0 0.0
    %256 = vmatpush2.msra.mxu0 0.0
    %257 = vmatprep.subr.mxu0 0.0
    %258 = vmatpush2.msra.mxu0 0.0
    %259 = vmatprep.subr.mxu0 0.0
    %260 = vmatpush2.msra.mxu0 0.0
    %261 = vmatprep.subr.mxu0 0.0
    %262 = vmatpush2.msra.mxu0 0.0
    %263 = vmatprep.subr.mxu0 0.0
    %264 = vmatpush2.msra.mxu0 0.0
    %265 = vmatprep.subr.mxu0 0.0
    %266 = vmatpush2.msra.mxu0 0.0
    %267 = vmatprep.mubr.f32.mxu0 0.0
    %268 = vmatmul.mubr.f32.gmra.mxu0 %v198
    %v269 = vpop.f32.mrf.mxu0
    %v270 = vadd.f32 %v194, %v269
    %v271 = vpop.f32.mrf.mxu0
    %272 = vmatprep.mubr.f32.mxu0 0.0
    %273 = vmatmul.mubr.f32.gmra.mxu0 %v201
    %v274 = vpop.f32.mrf.mxu0
    %v275 = vadd.f32 %v194, %v274
    %v276 = vpop.f32.mrf.mxu0
    %277 = vdwg.mxu0
    %v278 = vmax.f32 %v270, 0.0
    %v279 = vmax.f32 %v275, 0.0
    %v281 = vlaneseq
    %v282 = vshrl.u32 %v281, 7
    %v283 = vsub.s32 0, %v282
    %v284 = vrot.slane %v97, %v283
    %v287 = vsel %vm196, %v278, 0
    %v290 = vsel %vm196, %v279, 0
    %292 = vmatprep.subr.mxu0 0.0
    %293 = vmatpush1.msra.mxu0 0.0
    %294 = vmatprep.subr.mxu0 0.0
    %295 = vmatpush1.msra.mxu0 0.0
    %296 = vmatprep.subr.mxu0 0.0
    %297 = vmatpush1.msra.mxu0 0.0
    %298 = vmatprep.subr.mxu0 0.0
    %299 = vmatpush1.msra.mxu0 0.0
    %300 = vmatprep.subr.mxu0 0.0
    %301 = vmatpush1.msra.mxu0 0.0
    %302 = vmatprep.subr.mxu0 0.0
    %303 = vmatpush1.msra.mxu0 0.0
    %304 = vmatprep.subr.mxu0 0.0
    %305 = vmatpush1.msra.mxu0 0.0
    %306 = vmatprep.subr.mxu0 0.0
    %307 = vmatpush1.msra.mxu0 0.0
    %308 = vmatprep.subr.mxu0 0.0
    %309 = vmatpush1.msra.mxu0 %v94
    %310 = vmatprep.subr.mxu0 0.0
    %311 = vmatpush1.msra.mxu0 %v93
    %312 = vmatprep.subr.mxu0 0.0
    %313 = vmatpush1.msra.mxu0 %v92
    %314 = vmatprep.subr.mxu0 0.0
    %315 = vmatpush1.msra.mxu0 %v91
    %316 = vmatprep.subr.mxu0 0.0
    %317 = vmatpush1.msra.mxu0 %v90
    %318 = vmatprep.subr.mxu0 0.0
    %319 = vmatpush1.msra.mxu0 %v89
    %320 = vmatprep.subr.mxu0 0.0
    %321 = vmatpush1.msra.mxu0 %v88
    %322 = vmatprep.subr.mxu0 0.0
    %323 = vmatpush1.msra.mxu0 %v87
    %324 = vmatprep.subr.mxu0 0.0
    %325 = vmatpush2.msra.mxu0 0.0
    %326 = vmatprep.subr.mxu0 0.0
    %327 = vmatpush2.msra.mxu0 0.0
    %328 = vmatprep.subr.mxu0 0.0
    %329 = vmatpush2.msra.mxu0 0.0
    %330 = vmatprep.subr.mxu0 0.0
    %331 = vmatpush2.msra.mxu0 0.0
    %332 = vmatprep.subr.mxu0 0.0
    %333 = vmatpush2.msra.mxu0 0.0
    %334 = vmatprep.subr.mxu0 0.0
    %335 = vmatpush2.msra.mxu0 0.0
    %336 = vmatprep.subr.mxu0 0.0
    %337 = vmatpush2.msra.mxu0 0.0
    %338 = vmatprep.subr.mxu0 0.0
    %339 = vmatpush2.msra.mxu0 0.0
    %340 = vmatprep.subr.mxu0 0.0
    %341 = vmatpush2.msra.mxu0 0.0
    %342 = vmatprep.subr.mxu0 0.0
    %343 = vmatpush2.msra.mxu0 0.0
    %344 = vmatprep.subr.mxu0 0.0
    %345 = vmatpush2.msra.mxu0 0.0
    %346 = vmatprep.subr.mxu0 0.0
    %347 = vmatpush2.msra.mxu0 0.0
    %348 = vmatprep.subr.mxu0 0.0
    %349 = vmatpush2.msra.mxu0 0.0
    %350 = vmatprep.subr.mxu0 0.0
    %351 = vmatpush2.msra.mxu0 0.0
    %352 = vmatprep.subr.mxu0 0.0
    %353 = vmatpush2.msra.mxu0 0.0
    %354 = vmatprep.subr.mxu0 0.0
    %355 = vmatpush2.msra.mxu0 0.0
    %356 = vmatprep.mubr.f32.mxu0 0.0
    %357 = vmatmul.mubr.f32.gmra.mxu0 %v287
    %v358 = vpop.f32.mrf.mxu0
    %v359 = vadd.f32 %v284, %v358
    %v360 = vpop.f32.mrf.mxu0
    %361 = vmatprep.mubr.f32.mxu0 0.0
    %362 = vmatmul.mubr.f32.gmra.mxu0 %v290
    %v363 = vpop.f32.mrf.mxu0
    %v364 = vadd.f32 %v284, %v363
    %v365 = vpop.f32.mrf.mxu0
    %366 = vdwg.mxu0
    %vm367 = vcmask 130048
    %368 = vst.msk [vmem:[%s7] sm:$0xff] %vm367, %v359
    %369 = vst.msk [vmem:[%s7 + $0x8] sm:$0xff] %vm367, %v364
    // Predicated region
    $region46: #{deterministic_decoder_forward.1} parent=1 // pred_check
      _
    $region47: #{deterministic_decoder_forward.1} parent=1 // pred_check_branch
      %371 = sbr.rel (0) target = $region49
    $region48: #{deterministic_decoder_forward.1} parent=1 // pred_region
      _
    $region49: #{deterministic_decoder_forward.1} parent=1 // pred_fallthru
      _
    // Predicated region
    $region50: #{deterministic_decoder_forward.1} parent=1 // pred_check
      _
    $region51: #{deterministic_decoder_forward.1} parent=1 // pred_check_branch
      %373 = sbr.rel (0) target = $region53
    $region52: #{deterministic_decoder_forward.1} parent=1 // pred_region
      _
    $region53: #{deterministic_decoder_forward.1} parent=1 // pred_fallthru
      _
    %374 = vsyncpa [#allocation3], 1
    %375 = vsyncpa [#allocation5], 1
    %376 = vsyncpa [#allocation8], 1

</llo_original>
